<compile_context>
chip_gen: v7x
topology: tpu7x:2x2x1
jax: 0.10.0
libtpu: 0.0.40
codegen_flags: <defaults>
</compile_context>

<pallas_src>
import functools

import jax
import jax.numpy as jnp
from jax.experimental import pallas as pl
from jax.experimental.pallas import tpu as pltpu

_LANE = 128
_SUBLANE = 8


def _round_up(x, m):
    return ((x + m - 1) // m) * m


def _block_diag(blocks):
    """Block-diagonal matrix from same-shaped 2-D blocks (net-major order)."""
    n = len(blocks)
    r, c = blocks[0].shape
    zero = jnp.zeros((r, c), blocks[0].dtype)
    rows = [
        jnp.concatenate([blk if j == i else zero for j in range(n)], axis=1)
        for i, blk in enumerate(blocks)
    ]
    return jnp.concatenate(rows, axis=0)


def build_fused_params(weights, biases):
    """Fuse per-net params into ONE packed, (8,128)-aligned f32 buffer.

    weights[l]: (num_nets, d_in, d_out); biases[l]: (num_nets, 1, d_out).
    Layer 0 shares x across nets -> column-concatenate the weights.
    Layers >= 1 act per-net -> block-diagonal weights (net-major columns, so
    the final activation is already in torch.cat(preds, dim=1) order).
    Each layer's [W; b] rows are stacked at an 8-aligned row offset inside a
    single buffer whose width is a multiple of 128 (zero padded).

    Returns (packed, layout) with layout = tuple of (row_off, d_in, d_out).
    """
    fused = []
    for l, (w, b) in enumerate(zip(weights, biases)):
        num_nets, d_in, d_out = w.shape
        if l == 0:
            w_f = jnp.transpose(w, (1, 0, 2)).reshape(d_in, num_nets * d_out)
        else:
            w_f = _block_diag([w[n] for n in range(num_nets)])
        b_f = b.reshape(1, num_nets * d_out)
        # [W; b] -> bias is the last row of this layer's block.
        fused.append(jnp.concatenate([w_f, b_f], axis=0).astype(jnp.float32))

    buf_cols = _round_up(max(f.shape[1] for f in fused), _LANE)
    layout = []
    row_off = 0
    padded_blocks = []
    for f in fused:
        rows, cols = f.shape
        block_rows = _round_up(rows, _SUBLANE)
        blk = jnp.zeros((block_rows, buf_cols), jnp.float32)
        blk = blk.at[:rows, :cols].set(f)
        padded_blocks.append(blk)
        layout.append((row_off, rows - 1, cols))  # d_in = rows - 1 (bias row)
        row_off += block_rows
    packed = jnp.concatenate(padded_blocks, axis=0)
    return packed, tuple(layout)


def _pfnn_kernel(x_ref, p_ref, o_ref, *, layout, out_cols):
    """One batch tile through all fused layers; params fully VMEM-resident.

    p_ref holds every layer's fused [W; b] block at a static row offset.
    """
    h = x_ref[...].astype(jnp.float32)
    n_layers = len(layout)
    for l, (row_off, d_in, d_out) in enumerate(layout):
        cols = out_cols if l == n_layers - 1 else d_out
        w = p_ref[row_off:row_off + d_in, :cols]
        b = p_ref[row_off + d_in:row_off + d_in + 1, :cols]
        # The PyTorch module applies the activation after EVERY Linear layer,
        # including the last one (its special-case branch never fires).
        h = jnp.tanh(jnp.dot(h, w, preferred_element_type=jnp.float32) + b)
    o_ref[...] = h.astype(o_ref.dtype)


def make_pfnn(weights, biases, *, block_batch=128):
    """Build a PFNN forward callable.

    Parameter fusion/packing happens ONCE here (not on every call), and the
    returned function passes the already-packed buffer into the kernel.
    Output layout matches torch.cat(preds, dim=1): (batch, num_nets * out).
    """
    packed, layout = build_fused_params(weights, biases)
    packed = jax.device_put(packed)

    in_dim = weights[0].shape[1]
    num_nets = weights[0].shape[0]
    out_valid = num_nets * weights[-1].shape[-1]      # torch.cat(dim=1) width
    out_cols = _round_up(out_valid, _LANE)            # lane-dense store width
    p_rows, p_cols = packed.shape

    # Scaling guard: the block-diagonal fusion is only FLOP-free while the
    # fused width fits one MXU tile (128 lanes on v5e, 256 on v6e/v7x).
    # TODO(synk): above that, switch layers >= 1 to per-net matmuls instead of
    # one dense block-diagonal matmul (the zero blocks become real MXU work).

    kernel = functools.partial(_pfnn_kernel, layout=layout, out_cols=out_cols)

    @jax.jit
    def forward(x, params):
        batch = x.shape[0]
        tb = min(block_batch, _round_up(batch, _SUBLANE))
        padded_batch = _round_up(batch, tb)
        if padded_batch != batch:
            x = jnp.pad(x, ((0, padded_batch - batch), (0, 0)))
        n_blocks = padded_batch // tb

        flops = 2 * padded_batch * sum(
            d_in * (out_cols if l == len(layout) - 1 else d_out)
            for l, (_, d_in, d_out) in enumerate(layout))
        transc = padded_batch * sum(
            (out_cols if l == len(layout) - 1 else d_out)
            for l, (_, _, d_out) in enumerate(layout))
        bytes_accessed = 4 * (padded_batch * in_dim + p_rows * p_cols
                              + padded_batch * out_cols)

        out = pl.pallas_call(
            kernel,
            out_shape=jax.ShapeDtypeStruct((padded_batch, out_cols), x.dtype),
            grid=(n_blocks,),
            in_specs=[
                pl.BlockSpec((tb, in_dim), lambda i: (i, 0)),
                # Constant index_map -> packed params stay VMEM-resident
                # across all grid steps (single DMA, no re-fetch).
                pl.BlockSpec((p_rows, p_cols), lambda i: (0, 0)),
            ],
            out_specs=pl.BlockSpec((tb, out_cols), lambda i: (i, 0)),
            compiler_params=pltpu.CompilerParams(
                dimension_semantics=("parallel",)),
            cost_estimate=pl.CostEstimate(
                flops=flops, transcendentals=transc,
                bytes_accessed=bytes_accessed),
        )(x, params)
        return out[:batch, :out_valid]

    return lambda x: forward(x, packed)


def init_pfnn_params(key, seq_net):
    """Deterministic PyTorch-Linear-style init (uniform +/- 1/sqrt(fan_in)).

    Per-layer parameters of all parallel nets are stacked on a leading
    "net" axis: weights[l] is (num_nets, seq_net[l], seq_net[l+1]),
    biases[l] is (num_nets, 1, seq_net[l+1]).
    """
    num_nets = seq_net[-1]
    num_layers = len(seq_net)
    weights, biases = [], []
    for j in range(num_layers - 1):
        fan_in, fan_out = seq_net[j], seq_net[j + 1]
        key, kw, kb = jax.random.split(key, 3)
        bound = 1.0 / float(fan_in) ** 0.5
        w = jax.random.uniform(
            kw, (num_nets, fan_in, fan_out), jnp.float32, -bound, bound)
        b = jax.random.uniform(
            kb, (num_nets, 1, fan_out), jnp.float32, -bound, bound)
        weights.append(w)
        biases.append(b)
    return weights, biases


def pfnn_reference(x, weights, biases):
    """Pure-JAX replica of the PyTorch forward pass (per-net loop + cat)."""
    num_nets = weights[0].shape[0]
    preds = []
    for n in range(num_nets):
        h = x
        for w, b in zip(weights, biases):
            h = jnp.tanh(h @ w[n] + b[n][0])
        preds.append(h)
    return jnp.concatenate(preds, axis=1)


if __name__ == "__main__":
    # seq_net = [in=4, hidden=32, hidden=32, out=2] with tanh activation
    # => 2 parallel nets, each producing 2 features => final width 4.
    seq_net = (4, 32, 32, 2)
    batch = 256  # 2 grid tiles of 128 rows; params stay resident across tiles

    key = jax.random.PRNGKey(0)
    key, kx = jax.random.split(key)
    x = jax.random.normal(kx, (batch, seq_net[0]), jnp.float32)
    weights, biases = init_pfnn_params(key, seq_net)

    pfnn = make_pfnn(weights, biases, block_batch=128)
    y = jax.block_until_ready(pfnn(x))
    y_ref = pfnn_reference(x, weights, biases)

    assert y.shape == (batch, seq_net[-1] * seq_net[-1]), y.shape
    assert jnp.allclose(y, y_ref, atol=1e-5, rtol=1e-5), "mismatch vs reference"

    print("KERNEL_OK")
</pallas_src>

<mosaic_0001>
module attributes {stable_mosaic.version = 11 : i64} {
  func.func @_pfnn_kernel(%arg0: i32, %arg1: memref<128x4xf32, #tpu.memory_space<vmem>>, %arg2: memref<152x128xf32, #tpu.memory_space<vmem>>, %arg3: memref<128x128xf32, #tpu.memory_space<vmem>>) attributes {dimension_semantics = [#tpu.dimension_semantics<parallel>], iteration_bounds = array<i64: 2>, scalar_prefetch = 0 : i64, scratch_operands = 0 : i64, tpu.core_type = #tpu.core_type<tc>, window_params = [{transform_indices = @transform_0, window_bounds = array<i64: 128, 4>}, {pipeline_mode = #tpu.pipeline_mode<synchronous>, transform_indices = @transform_1, window_bounds = array<i64: 152, 128>}, {transform_indices = @transform_2, window_bounds = array<i64: 128, 128>}]} {
    %c0 = arith.constant 0 : index
    %c0_0 = arith.constant 0 : index
    %0 = vector.load %arg1[%c0, %c0_0] : memref<128x4xf32, #tpu.memory_space<vmem>>, vector<128x4xf32>
    %c0_1 = arith.constant 0 : index
    %c0_2 = arith.constant 0 : index
    %1 = vector.load %arg2[%c0_1, %c0_2] : memref<152x128xf32, #tpu.memory_space<vmem>>, vector<4x64xf32>
    %c4 = arith.constant 4 : index
    %c0_3 = arith.constant 0 : index
    %2 = vector.load %arg2[%c4, %c0_3] : memref<152x128xf32, #tpu.memory_space<vmem>>, vector<1x64xf32>
    %cst = arith.constant dense<0.000000e+00> : vector<128x64xf32>
    %3 = tpu.matmul %0, %1, %cst {dimension_numbers = #tpu.dot_dimension_numbers<[1], [0], [0], [1], [0, 0, 1, 1], [], []>} : vector<128x4xf32>, vector<4x64xf32>, vector<128x64xf32> -> vector<128x64xf32>
    %4 = vector.broadcast %2 : vector<1x64xf32> to vector<128x64xf32>
    %5 = arith.addf %3, %4 : vector<128x64xf32>
    %6 = math.tanh %5 : vector<128x64xf32>
    %c8 = arith.constant 8 : index
    %c0_4 = arith.constant 0 : index
    %7 = vector.load %arg2[%c8, %c0_4] : memref<152x128xf32, #tpu.memory_space<vmem>>, vector<64x64xf32>
    %c72 = arith.constant 72 : index
    %c0_5 = arith.constant 0 : index
    %8 = vector.load %arg2[%c72, %c0_5] : memref<152x128xf32, #tpu.memory_space<vmem>>, vector<1x64xf32>
    %cst_6 = arith.constant dense<0.000000e+00> : vector<128x64xf32>
    %9 = tpu.matmul %6, %7, %cst_6 {dimension_numbers = #tpu.dot_dimension_numbers<[1], [0], [0], [1], [0, 0, 1, 1], [], []>} : vector<128x64xf32>, vector<64x64xf32>, vector<128x64xf32> -> vector<128x64xf32>
    %10 = vector.broadcast %8 : vector<1x64xf32> to vector<128x64xf32>
    %11 = arith.addf %9, %10 : vector<128x64xf32>
    %12 = math.tanh %11 : vector<128x64xf32>
    %c80 = arith.constant 80 : index
    %c0_7 = arith.constant 0 : index
    %13 = vector.load %arg2[%c80, %c0_7] : memref<152x128xf32, #tpu.memory_space<vmem>>, vector<64x128xf32>
    %c144 = arith.constant 144 : index
    %c0_8 = arith.constant 0 : index
    %14 = vector.load %arg2[%c144, %c0_8] : memref<152x128xf32, #tpu.memory_space<vmem>>, vector<1x128xf32>
    %cst_9 = arith.constant dense<0.000000e+00> : vector<128x128xf32>
    %15 = tpu.matmul %12, %13, %cst_9 {dimension_numbers = #tpu.dot_dimension_numbers<[1], [0], [0], [1], [0, 0, 1, 1], [], []>} : vector<128x64xf32>, vector<64x128xf32>, vector<128x128xf32> -> vector<128x128xf32>
    %16 = vector.broadcast %14 : vector<1x128xf32> to vector<128x128xf32>
    %17 = arith.addf %15, %16 : vector<128x128xf32>
    %18 = math.tanh %17 : vector<128x128xf32>
    %c0_10 = arith.constant 0 : index
    %c0_11 = arith.constant 0 : index
    %19 = vector.load %arg3[%c0_10, %c0_11] : memref<128x128xf32, #tpu.memory_space<vmem>>, vector<128x128xf32>
    tpu.vector_store %arg3[%c0_10, %c0_11], %18 {strides = array<i32>} : memref<128x128xf32, #tpu.memory_space<vmem>>, vector<128x128xf32>,
    return
  }
  func.func @transform_0(%arg0: i32) -> (i32, i32) {
    %c0_i32 = arith.constant 0 : i32
    %c0_i32_0 = arith.constant 0 : i32
    return %arg0, %c0_i32 : i32, i32
  }
  func.func @transform_1(%arg0: i32) -> (i32, i32) {
    %c0_i32 = arith.constant 0 : i32
    %c0_i32_0 = arith.constant 0 : i32
    %c0_i32_1 = arith.constant 0 : i32
    return %c0_i32, %c0_i32_0 : i32, i32
  }
  func.func @transform_2(%arg0: i32) -> (i32, i32) {
    %c0_i32 = arith.constant 0 : i32
    %c0_i32_0 = arith.constant 0 : i32
    return %arg0, %c0_i32 : i32, i32
  }
}

</mosaic_0001>

<llo_original>
// kernel: forward.1
$region0: #{forward.1}
  #allocation0 [shape = 'u32[]', space=smem, size = 0x4, offset = 0x4, fixed_abs, tag = 'smem constant byte address 0x4 - core index']
  #allocation1 [shape = 'u32[144,128]{1,0:T(1,128)}', space=vmem, size = 0x12000, scoped, tag = 'internal scratch']
  %s0 = inlined_call_operand.vmem [shape: f32[256,4], index: 0, kind: input, shape index: {}]
  %s1 = inlined_call_operand.vmem [shape: f32[152,128], index: 1, kind: input, shape index: {}]
  %s2 = inlined_call_operand.vmem [shape: f32[256,128], index: 2, kind: output, shape index: {}]
  %s3 = sld [smem:[#allocation0]]
  $region41: #{forward.1} parent=0
    _
  %s5 = ssub.s32 1, %s3
  %s6 = scalar_select 0, %s5, %s3
  loop: start=0, step=1, limit=4
  $region2: #{forward.1} parent=0 // loop_pre_header
    _
  $region3: #{forward.1} parent=0 // loop_header
    %s8 = sphi 0, %s12
    %p9 = scmp.ge.s32.totalorder %s8, 4
    %s18 = sphi 0, %s20
    %s21 = sphi 0, %s18
    %s22 = sphi 0, %s21
    %s38 = sphi 0, %s22
    %s42 = sphi 0, %s42
    %s44 = sphi 0, %s42
    %s45 = sphi 0, %s44
    %s59 = sphi 0, %s45
    %s65 = sphi 0, %s67
    %s68 = sphi 0, %s65
    %s69 = sphi 0, %s68
    %s85 = sphi 0, %s69
  $region4: #{forward.1} parent=0 // loop_header_branch
    %11 = sbr.rel (%p9) target = $region8
  $region5: #{forward.1} parent=0 // loop_body
    %s13 = ssub.s32 %s8, 1
    %s14 = ssub.s32 %s8, 2
    %s15 = sadd.s32 %s8, 1
    %s16 = ssub.s32 %s8, %s15
    %p17 = scmp.eq.s32.totalorder %s16, 0
    %s19 = sadd.s32 %s18, 1
    %s20 = scalar_select %p17, %s18, %s19
    %p23 = pneg %p17
    %p24 = scmp.eq.s32.totalorder %s8, 1
    %p25 = por %p23, %p24
    %p26 = scmp.ne.s32.totalorder %s18, %s21
    %p27 = scmp.eq.s32.totalorder %s8, 0
    %p28 = por %p26, %p27
    %p29 = scmp.ne.s32.totalorder %s18, %s21
    %p30 = scmp.eq.s32.totalorder %s13, 1
    %p31 = por %p29, %p30
    %p32 = scmp.ne.s32.totalorder %s21, %s22
    %p33 = scmp.eq.s32.totalorder %s13, 0
    %p34 = por %p32, %p33
    %p35 = scmp.ne.s32.totalorder %s21, %s22
    %p36 = scmp.eq.s32.totalorder %s14, 1
    %p37 = por %p35, %p36
    %p39 = scmp.ne.s32.totalorder %s22, %s38
    %p40 = scmp.eq.s32.totalorder %s14, 0
    %p41 = por %p39, %p40
    %s43 = sadd.s32 %s42, 1
    %p46 = scmp.eq.s32.totalorder %s8, 1
    %p47 = scmp.ne.s32.totalorder %s42, %s44
    %p48 = scmp.eq.s32.totalorder %s8, 0
    %p49 = por %p47, %p48
    %p50 = scmp.ne.s32.totalorder %s42, %s44
    %p51 = scmp.eq.s32.totalorder %s13, 1
    %p52 = por %p50, %p51
    %p53 = scmp.ne.s32.totalorder %s44, %s45
    %p54 = scmp.eq.s32.totalorder %s13, 0
    %p55 = por %p53, %p54
    %p56 = scmp.ne.s32.totalorder %s44, %s45
    %p57 = scmp.eq.s32.totalorder %s14, 1
    %p58 = por %p56, %p57
    %p60 = scmp.ne.s32.totalorder %s45, %s59
    %p61 = scmp.eq.s32.totalorder %s14, 0
    %p62 = por %p60, %p61
    %s63 = ssub.s32 %s8, %s15
    %p64 = scmp.eq.s32.totalorder %s63, 0
    %s66 = sadd.s32 %s65, 1
    %s67 = scalar_select %p64, %s65, %s66
    %p70 = pneg %p64
    %p71 = scmp.eq.s32.totalorder %s8, 1
    %p72 = por %p70, %p71
    %p73 = scmp.ne.s32.totalorder %s65, %s68
    %p74 = scmp.eq.s32.totalorder %s8, 0
    %p75 = por %p73, %p74
    %p76 = scmp.ne.s32.totalorder %s65, %s68
    %p77 = scmp.eq.s32.totalorder %s13, 1
    %p78 = por %p76, %p77
    %p79 = scmp.ne.s32.totalorder %s68, %s69
    %p80 = scmp.eq.s32.totalorder %s13, 0
    %p81 = por %p79, %p80
    %p82 = scmp.ne.s32.totalorder %s68, %s69
    %p83 = scmp.eq.s32.totalorder %s14, 1
    %p84 = por %p82, %p83
    %p86 = scmp.ne.s32.totalorder %s69, %s85
    %p87 = scmp.eq.s32.totalorder %s14, 0
    %p88 = por %p86, %p87
    %p89 = scmp.le.s32.totalorder 1, %s8
    %p90 = scmp.lt.s32.totalorder %s8, 3
    %p91 = pnand %p89, %p90
    %p92 = pneg %p91
    // Predicated region
    $region9: #{forward.1} parent=5 // pred_check
      _
    $region10: #{forward.1} parent=5 // pred_check_branch
      %94 = sbr.rel (%p91) target = $region12
    $region11: #{forward.1} parent=5 // pred_region
      %s95 = ssub.s32 %s8, 1
      // Predicated region
      $region13: #{forward.1} parent=11 // pred_check
        %p96 = pneg %p55
      $region14: #{forward.1} parent=11 // pred_check_branch
        %98 = sbr.rel (%p96) target = $region16
      $region15: #{forward.1} parent=11 // pred_region
        _
      $region16: #{forward.1} parent=11 // pred_fallthru
        _
    $region12: #{forward.1} parent=5 // pred_fallthru
      _
    %p99 = scmp.lt.s32.totalorder %s8, 2
    // Predicated region
    $region17: #{forward.1} parent=5 // pred_check
      %p100 = pneg %p99
    $region18: #{forward.1} parent=5 // pred_check_branch
      %102 = sbr.rel (%p100) target = $region20
    $region19: #{forward.1} parent=5 // pred_region
      // Predicated region
      $region21: #{forward.1} parent=19 // pred_check
        %p103 = pneg %p28
      $region22: #{forward.1} parent=19 // pred_check_branch
        %105 = sbr.rel (%p103) target = $region24
      $region23: #{forward.1} parent=19 // pred_region
        %s106 = smul.u32 16, %s8
        %p107 = scmp.lt.s32.totalorder %s106, 31
        %s108 = scalar_select %p107, %s106, 31
        %s109 = smul.addr %s108, 8
        %s110 = scalar_lea.vmem %s0, %s109
        %s111 = smul.u32 16, %s8
      $region24: #{forward.1} parent=19 // pred_fallthru
        _
    $region20: #{forward.1} parent=5 // pred_fallthru
      _
    %p112 = scmp.le.s32.totalorder 1, %s8
    %p113 = scmp.lt.s32.totalorder %s8, 3
    %p114 = pnand %p112, %p113
    %p115 = pneg %p114
    // Predicated region
    $region25: #{forward.1} parent=5 // pred_check
      _
    $region26: #{forward.1} parent=5 // pred_check_branch
      %117 = sbr.rel (%p114) target = $region28
    $region27: #{forward.1} parent=5 // pred_region
      %s118 = ssub.s32 %s8, 1
      %s119 = smul.u32 16, %s13
      %p120 = scmp.lt.s32.totalorder %s119, 31
      %s121 = scalar_select %p120, %s119, 31
      %s122 = smul.addr %s121, 8
      %s123 = scalar_lea.vmem %s0, %s122
      %p124 = pneg %p34
      %p125 = pneg %p31
      %p126 = pneg %p55
      %p127 = pneg %p52
      %p128 = pneg %p81
      %p129 = pneg %p78
      %s130 = smul.u32 16, %s13
      %p131 = scmp.lt.s32.totalorder %s130, 31
      %s132 = scalar_select %p131, %s130, 31
      %s133 = smul.addr %s132, 8
      %s134 = scalar_lea.vmem %s2, %s133
      %s135 = smul.u32 16, %s13
      %p136 = scmp.lt.s32.totalorder %s135, 31
      %s137 = scalar_select %p136, %s135, 31
      %s138 = smul.addr %s137, 8
      %s139 = scalar_lea.vmem %s0, %s138
      %s140 = smul.u32 16, %s13
      %s141 = smul.u32 16, %s13
      %p142 = scmp.lt.s32.totalorder %s141, 31
      %s143 = scalar_select %p142, %s141, 31
      %s144 = smul.addr %s143, 8
      %s145 = scalar_lea.vmem %s2, %s144
      %s146 = smul.u32 16, %s13
      %v147 = vld [vmem:[%s139] sm:$0xff]
      %v148 = vld [vmem:[%s139 + $0x8] sm:$0xff]
      %v149 = vld [vmem:[%s139 + $0x10] sm:$0xff]
      %v150 = vld [vmem:[%s139 + $0x18] sm:$0xff]
      %v151 = vld [vmem:[%s139 + $0x20] sm:$0xff]
      %v152 = vld [vmem:[%s139 + $0x28] sm:$0xff]
      %v153 = vld [vmem:[%s139 + $0x30] sm:$0xff]
      %v154 = vld [vmem:[%s139 + $0x38] sm:$0xff]
      %v155 = vld [vmem:[%s139 + $0x40] sm:$0xff]
      %v156 = vld [vmem:[%s139 + $0x48] sm:$0xff]
      %v157 = vld [vmem:[%s139 + $0x50] sm:$0xff]
      %v158 = vld [vmem:[%s139 + $0x58] sm:$0xff]
      %v159 = vld [vmem:[%s139 + $0x60] sm:$0xff]
      %v160 = vld [vmem:[%s139 + $0x68] sm:$0xff]
      %v161 = vld [vmem:[%s139 + $0x70] sm:$0xff]
      %v162 = vld [vmem:[%s139 + $0x78] sm:$0xff]
      %v163 = vld [vmem:[%s1] sm:$0xf]
      %v164 = vld [vmem:[%s1 + $0x4] sm:$0x1]
      %v165 = vlaneseq
      %v166 = vshrl.u32 %v165, 7
      %v167 = vsub.s32 0, %v166
      %v168 = vrot.slane %v164, %v167
      %vm169 = vcmask 31744
      %v171 = vsel %vm169, %v147, 0
      %v174 = vsel %vm169, %v148, 0
      %v177 = vsel %vm169, %v149, 0
      %v180 = vsel %vm169, %v150, 0
      %v183 = vsel %vm169, %v151, 0
      %v186 = vsel %vm169, %v152, 0
      %v189 = vsel %vm169, %v153, 0
      %v192 = vsel %vm169, %v154, 0
      %v195 = vsel %vm169, %v155, 0
      %v198 = vsel %vm169, %v156, 0
      %v201 = vsel %vm169, %v157, 0
      %v204 = vsel %vm169, %v158, 0
      %v207 = vsel %vm169, %v159, 0
      %v210 = vsel %vm169, %v160, 0
      %v213 = vsel %vm169, %v161, 0
      %v216 = vsel %vm169, %v162, 0
      %vm218 = vcmask 1043456
      %v220 = vsel %vm218, %v163, 0
      %222 = vmatprep.subr.mxu0 0.0
      %223 = vmatpush1.msra.mxu0 %v220
      %224 = vmatprep.subr.mxu0 0.0
      %225 = vmatpush1.msra.mxu0 0.0
      %226 = vmatprep.subr.mxu0 0.0
      %227 = vmatpush1.msra.mxu0 0.0
      %228 = vmatprep.subr.mxu0 0.0
      %229 = vmatpush1.msra.mxu0 0.0
      %230 = vmatprep.subr.mxu0 0.0
      %231 = vmatpush1.msra.mxu0 0.0
      %232 = vmatprep.subr.mxu0 0.0
      %233 = vmatpush1.msra.mxu0 0.0
      %234 = vmatprep.subr.mxu0 0.0
      %235 = vmatpush1.msra.mxu0 0.0
      %236 = vmatprep.subr.mxu0 0.0
      %237 = vmatpush1.msra.mxu0 0.0
      %238 = vmatprep.subr.mxu0 0.0
      %239 = vmatpush1.msra.mxu0 0.0
      %240 = vmatprep.subr.mxu0 0.0
      %241 = vmatpush1.msra.mxu0 0.0
      %242 = vmatprep.subr.mxu0 0.0
      %243 = vmatpush1.msra.mxu0 0.0
      %244 = vmatprep.subr.mxu0 0.0
      %245 = vmatpush1.msra.mxu0 0.0
      %246 = vmatprep.subr.mxu0 0.0
      %247 = vmatpush1.msra.mxu0 0.0
      %248 = vmatprep.subr.mxu0 0.0
      %249 = vmatpush1.msra.mxu0 0.0
      %250 = vmatprep.subr.mxu0 0.0
      %251 = vmatpush1.msra.mxu0 0.0
      %252 = vmatprep.subr.mxu0 0.0
      %253 = vmatpush1.msra.mxu0 0.0
      %254 = vmatprep.subr.mxu0 0.0
      %255 = vmatpush1.msra.mxu0 0.0
      %256 = vmatprep.subr.mxu0 0.0
      %257 = vmatpush1.msra.mxu0 0.0
      %258 = vmatprep.subr.mxu0 0.0
      %259 = vmatpush1.msra.mxu0 0.0
      %260 = vmatprep.subr.mxu0 0.0
      %261 = vmatpush1.msra.mxu0 0.0
      %262 = vmatprep.subr.mxu0 0.0
      %263 = vmatpush1.msra.mxu0 0.0
      %264 = vmatprep.subr.mxu0 0.0
      %265 = vmatpush1.msra.mxu0 0.0
      %266 = vmatprep.subr.mxu0 0.0
      %267 = vmatpush1.msra.mxu0 0.0
      %268 = vmatprep.subr.mxu0 0.0
      %269 = vmatpush1.msra.mxu0 0.0
      %270 = vmatprep.subr.mxu0 0.0
      %271 = vmatpush1.msra.mxu0 0.0
      %272 = vmatprep.subr.mxu0 0.0
      %273 = vmatpush1.msra.mxu0 0.0
      %274 = vmatprep.subr.mxu0 0.0
      %275 = vmatpush1.msra.mxu0 0.0
      %276 = vmatprep.subr.mxu0 0.0
      %277 = vmatpush1.msra.mxu0 0.0
      %278 = vmatprep.subr.mxu0 0.0
      %279 = vmatpush1.msra.mxu0 0.0
      %280 = vmatprep.subr.mxu0 0.0
      %281 = vmatpush1.msra.mxu0 0.0
      %282 = vmatprep.subr.mxu0 0.0
      %283 = vmatpush1.msra.mxu0 0.0
      %284 = vmatprep.subr.mxu0 0.0
      %285 = vmatpush1.msra.mxu0 0.0
      %286 = vmatprep.mubr.f32.mxu0 0.0
      %287 = vmatmul.mubr.f32.gmra.mrb[0].mxu0 %v171
      %v288 = vpop.f32.mrb[0].mxu0
      %v289 = vadd.f32 %v168, %v288
      %v290 = vpop.f32.mrb[0].mxu0
      %291 = vmatprep.mubr.f32.mxu0 0.0
      %292 = vmatmul.mubr.f32.gmra.mrb[0].mxu0 %v174
      %v293 = vpop.f32.mrb[0].mxu0
      %v294 = vadd.f32 %v168, %v293
      %v295 = vpop.f32.mrb[0].mxu0
      %296 = vmatprep.mubr.f32.mxu0 0.0
      %297 = vmatmul.mubr.f32.gmra.mrb[0].mxu0 %v177
      %v298 = vpop.f32.mrb[0].mxu0
      %v299 = vadd.f32 %v168, %v298
      %v300 = vpop.f32.mrb[0].mxu0
      %301 = vmatprep.mubr.f32.mxu0 0.0
      %302 = vmatmul.mubr.f32.gmra.mrb[0].mxu0 %v180
      %v303 = vpop.f32.mrb[0].mxu0
      %v304 = vadd.f32 %v168, %v303
      %v305 = vpop.f32.mrb[0].mxu0
      %306 = vmatprep.mubr.f32.mxu0 0.0
      %307 = vmatmul.mubr.f32.gmra.mrb[0].mxu0 %v183
      %v308 = vpop.f32.mrb[0].mxu0
      %v309 = vadd.f32 %v168, %v308
      %v310 = vpop.f32.mrb[0].mxu0
      %311 = vmatprep.mubr.f32.mxu0 0.0
      %312 = vmatmul.mubr.f32.gmra.mrb[0].mxu0 %v186
      %v313 = vpop.f32.mrb[0].mxu0
      %v314 = vadd.f32 %v168, %v313
      %v315 = vpop.f32.mrb[0].mxu0
      %316 = vmatprep.mubr.f32.mxu0 0.0
      %317 = vmatmul.mubr.f32.gmra.mrb[0].mxu0 %v189
      %v318 = vpop.f32.mrb[0].mxu0
      %v319 = vadd.f32 %v168, %v318
      %v320 = vpop.f32.mrb[0].mxu0
      %321 = vmatprep.mubr.f32.mxu0 0.0
      %322 = vmatmul.mubr.f32.gmra.mrb[0].mxu0 %v192
      %v323 = vpop.f32.mrb[0].mxu0
      %v324 = vadd.f32 %v168, %v323
      %v325 = vpop.f32.mrb[0].mxu0
      %326 = vmatprep.mubr.f32.mxu0 0.0
      %327 = vmatmul.mubr.f32.gmra.mrb[0].mxu0 %v195
      %v328 = vpop.f32.mrb[0].mxu0
      %v329 = vadd.f32 %v168, %v328
      %v330 = vpop.f32.mrb[0].mxu0
      %331 = vmatprep.mubr.f32.mxu0 0.0
      %332 = vmatmul.mubr.f32.gmra.mrb[0].mxu0 %v198
      %v333 = vpop.f32.mrb[0].mxu0
      %v334 = vadd.f32 %v168, %v333
      %v335 = vpop.f32.mrb[0].mxu0
      %336 = vmatprep.mubr.f32.mxu0 0.0
      %337 = vmatmul.mubr.f32.gmra.mrb[0].mxu0 %v201
      %v338 = vpop.f32.mrb[0].mxu0
      %v339 = vadd.f32 %v168, %v338
      %v340 = vpop.f32.mrb[0].mxu0
      %341 = vmatprep.mubr.f32.mxu0 0.0
      %342 = vmatmul.mubr.f32.gmra.mrb[0].mxu0 %v204
      %v343 = vpop.f32.mrb[0].mxu0
      %v344 = vadd.f32 %v168, %v343
      %v345 = vpop.f32.mrb[0].mxu0
      %346 = vmatprep.mubr.f32.mxu0 0.0
      %347 = vmatmul.mubr.f32.gmra.mrb[0].mxu0 %v207
      %v348 = vpop.f32.mrb[0].mxu0
      %v349 = vadd.f32 %v168, %v348
      %v350 = vpop.f32.mrb[0].mxu0
      %351 = vmatprep.mubr.f32.mxu0 0.0
      %352 = vmatmul.mubr.f32.gmra.mrb[0].mxu0 %v210
      %v353 = vpop.f32.mrb[0].mxu0
      %v354 = vadd.f32 %v168, %v353
      %v355 = vpop.f32.mrb[0].mxu0
      %356 = vmatprep.mubr.f32.mxu0 0.0
      %357 = vmatmul.mubr.f32.gmra.mrb[0].mxu0 %v213
      %v358 = vpop.f32.mrb[0].mxu0
      %v359 = vadd.f32 %v168, %v358
      %v360 = vpop.f32.mrb[0].mxu0
      %361 = vmatprep.mubr.f32.mxu0 0.0
      %362 = vmatmul.mubr.f32.gmra.mrb[0].mxu0 %v216
      %v363 = vpop.f32.mrb[0].mxu0
      %v364 = vadd.f32 %v168, %v363
      %v365 = vpop.f32.mrb[0].mxu0
      %366 = vdwg.mxu0
      %v367 = vtanh.pop %v289
      %v368 = vtanh.pop %v294
      %v369 = vtanh.pop %v299
      %v370 = vtanh.pop %v304
      %v371 = vtanh.pop %v309
      %v372 = vtanh.pop %v314
      %v373 = vtanh.pop %v319
      %v374 = vtanh.pop %v324
      %v375 = vtanh.pop %v329
      %v376 = vtanh.pop %v334
      %v377 = vtanh.pop %v339
      %v378 = vtanh.pop %v344
      %v379 = vtanh.pop %v349
      %v380 = vtanh.pop %v354
      %v381 = vtanh.pop %v359
      %v382 = vtanh.pop %v364
      %v383 = vld [vmem:[%s1 + $0x8] sm:$0xff]
      %v384 = vld [vmem:[%s1 + $0x10] sm:$0xff]
      %v385 = vld [vmem:[%s1 + $0x18] sm:$0xff]
      %v386 = vld [vmem:[%s1 + $0x20] sm:$0xff]
      %v387 = vld [vmem:[%s1 + $0x28] sm:$0xff]
      %v388 = vld [vmem:[%s1 + $0x30] sm:$0xff]
      %v389 = vld [vmem:[%s1 + $0x38] sm:$0xff]
      %v390 = vld [vmem:[%s1 + $0x40] sm:$0xff]
      %v391 = vld [vmem:[%s1 + $0x48] sm:$0x1]
      %v392 = vlaneseq
      %v393 = vshrl.u32 %v392, 7
      %v394 = vsub.s32 0, %v393
      %v395 = vrot.slane %v391, %v394
      %vm396 = vcmask 523264
      %v398 = vsel %vm396, %v367, 0
      %v401 = vsel %vm396, %v368, 0
      %v404 = vsel %vm396, %v369, 0
      %v407 = vsel %vm396, %v370, 0
      %v410 = vsel %vm396, %v371, 0
      %v413 = vsel %vm396, %v372, 0
      %v416 = vsel %vm396, %v373, 0
      %v419 = vsel %vm396, %v374, 0
      %v422 = vsel %vm396, %v375, 0
      %v425 = vsel %vm396, %v376, 0
      %v428 = vsel %vm396, %v377, 0
      %v431 = vsel %vm396, %v378, 0
      %v434 = vsel %vm396, %v379, 0
      %v437 = vsel %vm396, %v380, 0
      %v440 = vsel %vm396, %v381, 0
      %v443 = vsel %vm396, %v382, 0
      %445 = vmatprep.subr.mxu0 0.0
      %446 = vmatpush1.msra.mxu0 %v383
      %447 = vmatprep.subr.mxu0 0.0
      %448 = vmatpush1.msra.mxu0 %v384
      %449 = vmatprep.subr.mxu0 0.0
      %450 = vmatpush1.msra.mxu0 %v385
      %451 = vmatprep.subr.mxu0 0.0
      %452 = vmatpush1.msra.mxu0 %v386
      %453 = vmatprep.subr.mxu0 0.0
      %454 = vmatpush1.msra.mxu0 %v387
      %455 = vmatprep.subr.mxu0 0.0
      %456 = vmatpush1.msra.mxu0 %v388
      %457 = vmatprep.subr.mxu0 0.0
      %458 = vmatpush1.msra.mxu0 %v389
      %459 = vmatprep.subr.mxu0 0.0
      %460 = vmatpush1.msra.mxu0 %v390
      %461 = vmatprep.subr.mxu0 0.0
      %462 = vmatpush1.msra.mxu0 0.0
      %463 = vmatprep.subr.mxu0 0.0
      %464 = vmatpush1.msra.mxu0 0.0
      %465 = vmatprep.subr.mxu0 0.0
      %466 = vmatpush1.msra.mxu0 0.0
      %467 = vmatprep.subr.mxu0 0.0
      %468 = vmatpush1.msra.mxu0 0.0
      %469 = vmatprep.subr.mxu0 0.0
      %470 = vmatpush1.msra.mxu0 0.0
      %471 = vmatprep.subr.mxu0 0.0
      %472 = vmatpush1.msra.mxu0 0.0
      %473 = vmatprep.subr.mxu0 0.0
      %474 = vmatpush1.msra.mxu0 0.0
      %475 = vmatprep.subr.mxu0 0.0
      %476 = vmatpush1.msra.mxu0 0.0
      %477 = vmatprep.subr.mxu0 0.0
      %478 = vmatpush1.msra.mxu0 0.0
      %479 = vmatprep.subr.mxu0 0.0
      %480 = vmatpush1.msra.mxu0 0.0
      %481 = vmatprep.subr.mxu0 0.0
      %482 = vmatpush1.msra.mxu0 0.0
      %483 = vmatprep.subr.mxu0 0.0
      %484 = vmatpush1.msra.mxu0 0.0
      %485 = vmatprep.subr.mxu0 0.0
      %486 = vmatpush1.msra.mxu0 0.0
      %487 = vmatprep.subr.mxu0 0.0
      %488 = vmatpush1.msra.mxu0 0.0
      %489 = vmatprep.subr.mxu0 0.0
      %490 = vmatpush1.msra.mxu0 0.0
      %491 = vmatprep.subr.mxu0 0.0
      %492 = vmatpush1.msra.mxu0 0.0
      %493 = vmatprep.subr.mxu0 0.0
      %494 = vmatpush1.msra.mxu0 0.0
      %495 = vmatprep.subr.mxu0 0.0
      %496 = vmatpush1.msra.mxu0 0.0
      %497 = vmatprep.subr.mxu0 0.0
      %498 = vmatpush1.msra.mxu0 0.0
      %499 = vmatprep.subr.mxu0 0.0
      %500 = vmatpush1.msra.mxu0 0.0
      %501 = vmatprep.subr.mxu0 0.0
      %502 = vmatpush1.msra.mxu0 0.0
      %503 = vmatprep.subr.mxu0 0.0
      %504 = vmatpush1.msra.mxu0 0.0
      %505 = vmatprep.subr.mxu0 0.0
      %506 = vmatpush1.msra.mxu0 0.0
      %507 = vmatprep.subr.mxu0 0.0
      %508 = vmatpush1.msra.mxu0 0.0
      %509 = vmatprep.mubr.f32.mxu0 0.0
      %510 = vmatmul.mubr.f32.gmra.mrb[0].mxu0 %v398
      %v511 = vpop.f32.mrb[0].mxu0
      %v512 = vadd.f32 %v395, %v511
      %v513 = vpop.f32.mrb[0].mxu0
      %514 = vmatprep.mubr.f32.mxu0 0.0
      %515 = vmatmul.mubr.f32.gmra.mrb[0].mxu0 %v401
      %v516 = vpop.f32.mrb[0].mxu0
      %v517 = vadd.f32 %v395, %v516
      %v518 = vpop.f32.mrb[0].mxu0
      %519 = vmatprep.mubr.f32.mxu0 0.0
      %520 = vmatmul.mubr.f32.gmra.mrb[0].mxu0 %v404
      %v521 = vpop.f32.mrb[0].mxu0
      %v522 = vadd.f32 %v395, %v521
      %v523 = vpop.f32.mrb[0].mxu0
      %524 = vmatprep.mubr.f32.mxu0 0.0
      %525 = vmatmul.mubr.f32.gmra.mrb[0].mxu0 %v407
      %v526 = vpop.f32.mrb[0].mxu0
      %v527 = vadd.f32 %v395, %v526
      %v528 = vpop.f32.mrb[0].mxu0
      %529 = vmatprep.mubr.f32.mxu0 0.0
      %530 = vmatmul.mubr.f32.gmra.mrb[0].mxu0 %v410
      %v531 = vpop.f32.mrb[0].mxu0
      %v532 = vadd.f32 %v395, %v531
      %v533 = vpop.f32.mrb[0].mxu0
      %534 = vmatprep.mubr.f32.mxu0 0.0
      %535 = vmatmul.mubr.f32.gmra.mrb[0].mxu0 %v413
      %v536 = vpop.f32.mrb[0].mxu0
      %v537 = vadd.f32 %v395, %v536
      %v538 = vpop.f32.mrb[0].mxu0
      %539 = vmatprep.mubr.f32.mxu0 0.0
      %540 = vmatmul.mubr.f32.gmra.mrb[0].mxu0 %v416
      %v541 = vpop.f32.mrb[0].mxu0
      %v542 = vadd.f32 %v395, %v541
      %v543 = vpop.f32.mrb[0].mxu0
      %544 = vmatprep.mubr.f32.mxu0 0.0
      %545 = vmatmul.mubr.f32.gmra.mrb[0].mxu0 %v419
      %v546 = vpop.f32.mrb[0].mxu0
      %v547 = vadd.f32 %v395, %v546
      %v548 = vpop.f32.mrb[0].mxu0
      %549 = vmatprep.mubr.f32.mxu0 0.0
      %550 = vmatmul.mubr.f32.gmra.mrb[0].mxu0 %v422
      %v551 = vpop.f32.mrb[0].mxu0
      %v552 = vadd.f32 %v395, %v551
      %v553 = vpop.f32.mrb[0].mxu0
      %554 = vmatprep.mubr.f32.mxu0 0.0
      %555 = vmatmul.mubr.f32.gmra.mrb[0].mxu0 %v425
      %v556 = vpop.f32.mrb[0].mxu0
      %v557 = vadd.f32 %v395, %v556
      %v558 = vpop.f32.mrb[0].mxu0
      %559 = vmatprep.mubr.f32.mxu0 0.0
      %560 = vmatmul.mubr.f32.gmra.mrb[0].mxu0 %v428
      %v561 = vpop.f32.mrb[0].mxu0
      %v562 = vadd.f32 %v395, %v561
      %v563 = vpop.f32.mrb[0].mxu0
      %564 = vmatprep.mubr.f32.mxu0 0.0
      %565 = vmatmul.mubr.f32.gmra.mrb[0].mxu0 %v431
      %v566 = vpop.f32.mrb[0].mxu0
      %v567 = vadd.f32 %v395, %v566
      %v568 = vpop.f32.mrb[0].mxu0
      %569 = vmatprep.mubr.f32.mxu0 0.0
      %570 = vmatmul.mubr.f32.gmra.mrb[0].mxu0 %v434
      %v571 = vpop.f32.mrb[0].mxu0
      %v572 = vadd.f32 %v395, %v571
      %v573 = vpop.f32.mrb[0].mxu0
      %574 = vmatprep.mubr.f32.mxu0 0.0
      %575 = vmatmul.mubr.f32.gmra.mrb[0].mxu0 %v437
      %v576 = vpop.f32.mrb[0].mxu0
      %v577 = vadd.f32 %v395, %v576
      %v578 = vpop.f32.mrb[0].mxu0
      %579 = vmatprep.mubr.f32.mxu0 0.0
      %580 = vmatmul.mubr.f32.gmra.mrb[0].mxu0 %v440
      %v581 = vpop.f32.mrb[0].mxu0
      %v582 = vadd.f32 %v395, %v581
      %v583 = vpop.f32.mrb[0].mxu0
      %584 = vmatprep.mubr.f32.mxu0 0.0
      %585 = vmatmul.mubr.f32.gmra.mrb[0].mxu0 %v443
      %v586 = vpop.f32.mrb[0].mxu0
      %v587 = vadd.f32 %v395, %v586
      %v588 = vpop.f32.mrb[0].mxu0
      %589 = vdwg.mxu0
      %v590 = vtanh.pop %v512
      %v591 = vtanh.pop %v517
      %v592 = vtanh.pop %v522
      %v593 = vtanh.pop %v527
      %v594 = vtanh.pop %v532
      %v595 = vtanh.pop %v537
      %v596 = vtanh.pop %v542
      %v597 = vtanh.pop %v547
      %v598 = vtanh.pop %v552
      %v599 = vtanh.pop %v557
      %v600 = vtanh.pop %v562
      %v601 = vtanh.pop %v567
      %v602 = vtanh.pop %v572
      %v603 = vtanh.pop %v577
      %v604 = vtanh.pop %v582
      %v605 = vtanh.pop %v587
      %v606 = vld [vmem:[%s1 + $0x50] sm:$0xff]
      %v607 = vld [vmem:[%s1 + $0x58] sm:$0xff]
      %v608 = vld [vmem:[%s1 + $0x60] sm:$0xff]
      %v609 = vld [vmem:[%s1 + $0x68] sm:$0xff]
      %v610 = vld [vmem:[%s1 + $0x70] sm:$0xff]
      %v611 = vld [vmem:[%s1 + $0x78] sm:$0xff]
      %v612 = vld [vmem:[%s1 + $0x80] sm:$0xff]
      %v613 = vld [vmem:[%s1 + $0x88] sm:$0xff]
      %v614 = vld [vmem:[%s1 + $0x90] sm:$0x1]
      %v615 = vlaneseq
      %v616 = vshrl.u32 %v615, 7
      %v617 = vsub.s32 0, %v616
      %v618 = vrot.slane %v614, %v617
      %v620 = vsel %vm396, %v590, 0
      %v623 = vsel %vm396, %v591, 0
      %v626 = vsel %vm396, %v592, 0
      %v629 = vsel %vm396, %v593, 0
      %v632 = vsel %vm396, %v594, 0
      %v635 = vsel %vm396, %v595, 0
      %v638 = vsel %vm396, %v596, 0
      %v641 = vsel %vm396, %v597, 0
      %v644 = vsel %vm396, %v598, 0
      %v647 = vsel %vm396, %v599, 0
      %v650 = vsel %vm396, %v600, 0
      %v653 = vsel %vm396, %v601, 0
      %v656 = vsel %vm396, %v602, 0
      %v659 = vsel %vm396, %v603, 0
      %v662 = vsel %vm396, %v604, 0
      %v665 = vsel %vm396, %v605, 0
      %667 = vmatprep.subr.mxu0 0.0
      %668 = vmatpush1.msra.mxu0 %v606
      %669 = vmatprep.subr.mxu0 0.0
      %670 = vmatpush1.msra.mxu0 %v607
      %671 = vmatprep.subr.mxu0 0.0
      %672 = vmatpush1.msra.mxu0 %v608
      %673 = vmatprep.subr.mxu0 0.0
      %674 = vmatpush1.msra.mxu0 %v609
      %675 = vmatprep.subr.mxu0 0.0
      %676 = vmatpush1.msra.mxu0 %v610
      %677 = vmatprep.subr.mxu0 0.0
      %678 = vmatpush1.msra.mxu0 %v611
      %679 = vmatprep.subr.mxu0 0.0
      %680 = vmatpush1.msra.mxu0 %v612
      %681 = vmatprep.subr.mxu0 0.0
      %682 = vmatpush1.msra.mxu0 %v613
      %683 = vmatprep.subr.mxu0 0.0
      %684 = vmatpush1.msra.mxu0 0.0
      %685 = vmatprep.subr.mxu0 0.0
      %686 = vmatpush1.msra.mxu0 0.0
      %687 = vmatprep.subr.mxu0 0.0
      %688 = vmatpush1.msra.mxu0 0.0
      %689 = vmatprep.subr.mxu0 0.0
      %690 = vmatpush1.msra.mxu0 0.0
      %691 = vmatprep.subr.mxu0 0.0
      %692 = vmatpush1.msra.mxu0 0.0
      %693 = vmatprep.subr.mxu0 0.0
      %694 = vmatpush1.msra.mxu0 0.0
      %695 = vmatprep.subr.mxu0 0.0
      %696 = vmatpush1.msra.mxu0 0.0
      %697 = vmatprep.subr.mxu0 0.0
      %698 = vmatpush1.msra.mxu0 0.0
      %699 = vmatprep.subr.mxu0 0.0
      %700 = vmatpush1.msra.mxu0 0.0
      %701 = vmatprep.subr.mxu0 0.0
      %702 = vmatpush1.msra.mxu0 0.0
      %703 = vmatprep.subr.mxu0 0.0
      %704 = vmatpush1.msra.mxu0 0.0
      %705 = vmatprep.subr.mxu0 0.0
      %706 = vmatpush1.msra.mxu0 0.0
      %707 = vmatprep.subr.mxu0 0.0
      %708 = vmatpush1.msra.mxu0 0.0
      %709 = vmatprep.subr.mxu0 0.0
      %710 = vmatpush1.msra.mxu0 0.0
      %711 = vmatprep.subr.mxu0 0.0
      %712 = vmatpush1.msra.mxu0 0.0
      %713 = vmatprep.subr.mxu0 0.0
      %714 = vmatpush1.msra.mxu0 0.0
      %715 = vmatprep.subr.mxu0 0.0
      %716 = vmatpush1.msra.mxu0 0.0
      %717 = vmatprep.subr.mxu0 0.0
      %718 = vmatpush1.msra.mxu0 0.0
      %719 = vmatprep.subr.mxu0 0.0
      %720 = vmatpush1.msra.mxu0 0.0
      %721 = vmatprep.subr.mxu0 0.0
      %722 = vmatpush1.msra.mxu0 0.0
      %723 = vmatprep.subr.mxu0 0.0
      %724 = vmatpush1.msra.mxu0 0.0
      %725 = vmatprep.subr.mxu0 0.0
      %726 = vmatpush1.msra.mxu0 0.0
      %727 = vmatprep.subr.mxu0 0.0
      %728 = vmatpush1.msra.mxu0 0.0
      %729 = vmatprep.subr.mxu0 0.0
      %730 = vmatpush1.msra.mxu0 0.0
      %731 = vmatprep.mubr.f32.mxu0 0.0
      %732 = vmatmul.mubr.f32.gmra.mrb[0].mxu0 %v620
      %v733 = vpop.f32.mrb[0].mxu0
      %v734 = vadd.f32 %v618, %v733
      %v735 = vpop.f32.mrb[0].mxu0
      %736 = vmatprep.mubr.f32.mxu0 0.0
      %737 = vmatmul.mubr.f32.gmra.mrb[0].mxu0 %v623
      %v738 = vpop.f32.mrb[0].mxu0
      %v739 = vadd.f32 %v618, %v738
      %v740 = vpop.f32.mrb[0].mxu0
      %741 = vmatprep.mubr.f32.mxu0 0.0
      %742 = vmatmul.mubr.f32.gmra.mrb[0].mxu0 %v626
      %v743 = vpop.f32.mrb[0].mxu0
      %v744 = vadd.f32 %v618, %v743
      %v745 = vpop.f32.mrb[0].mxu0
      %746 = vmatprep.mubr.f32.mxu0 0.0
      %747 = vmatmul.mubr.f32.gmra.mrb[0].mxu0 %v629
      %v748 = vpop.f32.mrb[0].mxu0
      %v749 = vadd.f32 %v618, %v748
      %v750 = vpop.f32.mrb[0].mxu0
      %751 = vmatprep.mubr.f32.mxu0 0.0
      %752 = vmatmul.mubr.f32.gmra.mrb[0].mxu0 %v632
      %v753 = vpop.f32.mrb[0].mxu0
      %v754 = vadd.f32 %v618, %v753
      %v755 = vpop.f32.mrb[0].mxu0
      %756 = vmatprep.mubr.f32.mxu0 0.0
      %757 = vmatmul.mubr.f32.gmra.mrb[0].mxu0 %v635
      %v758 = vpop.f32.mrb[0].mxu0
      %v759 = vadd.f32 %v618, %v758
      %v760 = vpop.f32.mrb[0].mxu0
      %761 = vmatprep.mubr.f32.mxu0 0.0
      %762 = vmatmul.mubr.f32.gmra.mrb[0].mxu0 %v638
      %v763 = vpop.f32.mrb[0].mxu0
      %v764 = vadd.f32 %v618, %v763
      %v765 = vpop.f32.mrb[0].mxu0
      %766 = vmatprep.mubr.f32.mxu0 0.0
      %767 = vmatmul.mubr.f32.gmra.mrb[0].mxu0 %v641
      %v768 = vpop.f32.mrb[0].mxu0
      %v769 = vadd.f32 %v618, %v768
      %v770 = vpop.f32.mrb[0].mxu0
      %771 = vmatprep.mubr.f32.mxu0 0.0
      %772 = vmatmul.mubr.f32.gmra.mrb[0].mxu0 %v644
      %v773 = vpop.f32.mrb[0].mxu0
      %v774 = vadd.f32 %v618, %v773
      %v775 = vpop.f32.mrb[0].mxu0
      %776 = vmatprep.mubr.f32.mxu0 0.0
      %777 = vmatmul.mubr.f32.gmra.mrb[0].mxu0 %v647
      %v778 = vpop.f32.mrb[0].mxu0
      %v779 = vadd.f32 %v618, %v778
      %v780 = vpop.f32.mrb[0].mxu0
      %781 = vmatprep.mubr.f32.mxu0 0.0
      %782 = vmatmul.mubr.f32.gmra.mrb[0].mxu0 %v650
      %v783 = vpop.f32.mrb[0].mxu0
      %v784 = vadd.f32 %v618, %v783
      %v785 = vpop.f32.mrb[0].mxu0
      %786 = vmatprep.mubr.f32.mxu0 0.0
      %787 = vmatmul.mubr.f32.gmra.mrb[0].mxu0 %v653
      %v788 = vpop.f32.mrb[0].mxu0
      %v789 = vadd.f32 %v618, %v788
      %v790 = vpop.f32.mrb[0].mxu0
      %791 = vmatprep.mubr.f32.mxu0 0.0
      %792 = vmatmul.mubr.f32.gmra.mrb[0].mxu0 %v656
      %v793 = vpop.f32.mrb[0].mxu0
      %v794 = vadd.f32 %v618, %v793
      %v795 = vpop.f32.mrb[0].mxu0
      %796 = vmatprep.mubr.f32.mxu0 0.0
      %797 = vmatmul.mubr.f32.gmra.mrb[0].mxu0 %v659
      %v798 = vpop.f32.mrb[0].mxu0
      %v799 = vadd.f32 %v618, %v798
      %v800 = vpop.f32.mrb[0].mxu0
      %801 = vmatprep.mubr.f32.mxu0 0.0
      %802 = vmatmul.mubr.f32.gmra.mrb[0].mxu0 %v662
      %v803 = vpop.f32.mrb[0].mxu0
      %v804 = vadd.f32 %v618, %v803
      %v805 = vpop.f32.mrb[0].mxu0
      %806 = vmatprep.mubr.f32.mxu0 0.0
      %807 = vmatmul.mubr.f32.gmra.mrb[0].mxu0 %v665
      %v808 = vpop.f32.mrb[0].mxu0
      %v809 = vadd.f32 %v618, %v808
      %v810 = vpop.f32.mrb[0].mxu0
      %811 = vdwg.mxu0
      %v812 = vtanh.pop %v734
      %v813 = vtanh.pop %v739
      %v814 = vtanh.pop %v744
      %v815 = vtanh.pop %v749
      %v816 = vtanh.pop %v754
      %v817 = vtanh.pop %v759
      %v818 = vtanh.pop %v764
      %v819 = vtanh.pop %v769
      %v820 = vtanh.pop %v774
      %v821 = vtanh.pop %v779
      %v822 = vtanh.pop %v784
      %v823 = vtanh.pop %v789
      %v824 = vtanh.pop %v794
      %v825 = vtanh.pop %v799
      %v826 = vtanh.pop %v804
      %v827 = vtanh.pop %v809
      %828 = vst [vmem:[%s145] sm:$0xff] %v812
      %829 = vst [vmem:[%s145 + $0x8] sm:$0xff] %v813
      %830 = vst [vmem:[%s145 + $0x10] sm:$0xff] %v814
      %831 = vst [vmem:[%s145 + $0x18] sm:$0xff] %v815
      %832 = vst [vmem:[%s145 + $0x20] sm:$0xff] %v816
      %833 = vst [vmem:[%s145 + $0x28] sm:$0xff] %v817
      %834 = vst [vmem:[%s145 + $0x30] sm:$0xff] %v818
      %835 = vst [vmem:[%s145 + $0x38] sm:$0xff] %v819
      %836 = vst [vmem:[%s145 + $0x40] sm:$0xff] %v820
      %837 = vst [vmem:[%s145 + $0x48] sm:$0xff] %v821
      %838 = vst [vmem:[%s145 + $0x50] sm:$0xff] %v822
      %839 = vst [vmem:[%s145 + $0x58] sm:$0xff] %v823
      %840 = vst [vmem:[%s145 + $0x60] sm:$0xff] %v824
      %841 = vst [vmem:[%s145 + $0x68] sm:$0xff] %v825
      %842 = vst [vmem:[%s145 + $0x70] sm:$0xff] %v826
      %843 = vst [vmem:[%s145 + $0x78] sm:$0xff] %v827
      %s844 = smul.u32 16, %s13
      %p845 = scmp.lt.s32.totalorder %s844, 31
      %s846 = scalar_select %p845, %s844, 31
      %s847 = smul.addr %s846, 8
      %s848 = scalar_lea.vmem %s2, %s847
      // Predicated region
      $region29: #{forward.1} parent=27 // pred_check
        %p849 = pneg %p78
      $region30: #{forward.1} parent=27 // pred_check_branch
        %851 = sbr.rel (%p849) target = $region32
      $region31: #{forward.1} parent=27 // pred_region
        %s852 = smul.u32 16, %s13
      $region32: #{forward.1} parent=27 // pred_fallthru
        _
    $region28: #{forward.1} parent=5 // pred_fallthru
      _
    %p853 = scmp.le.s32.totalorder 2, %s8
    // Predicated region
    $region33: #{forward.1} parent=5 // pred_check
      %p854 = pneg %p853
    $region34: #{forward.1} parent=5 // pred_check_branch
      %856 = sbr.rel (%p854) target = $region36
    $region35: #{forward.1} parent=5 // pred_region
      %s857 = ssub.s32 %s8, 2
      // Predicated region
      $region37: #{forward.1} parent=35 // pred_check
        %p858 = pneg %p84
      $region38: #{forward.1} parent=35 // pred_check_branch
        %860 = sbr.rel (%p858) target = $region40
      $region39: #{forward.1} parent=35 // pred_region
        %s861 = smul.u32 16, %s14
        %p862 = scmp.lt.s32.totalorder %s861, 31
        %s863 = scalar_select %p862, %s861, 31
        %s864 = smul.addr %s863, 8
        %s865 = scalar_lea.vmem %s2, %s864
      $region40: #{forward.1} parent=35 // pred_fallthru
        _
    $region36: #{forward.1} parent=5 // pred_fallthru
      _
  $region6: #{forward.1} parent=0 // loop_footer
    %s12 = sadd.s32 1, %s8
  $region7: #{forward.1} parent=0 // loop_footer_branch
    %7 = sbr.rel target = $region3
  $region8: #{forward.1} parent=0 // loop_exit
    _

</llo_original>
